<compile_context>
chip_gen: v6e
topology: v6e:2x2x1
jax: 0.10.0
libtpu: 0.0.40
codegen_flags: <defaults>
</compile_context>

<pallas_src>
import functools

import jax
import jax.numpy as jnp
import numpy as np
from jax.experimental import pallas as pl
from jax.experimental.pallas import tpu as pltpu


def _round_up(x, m):
    return ((x + m - 1) // m) * m


def _nbytes(shape, dtype):
    return int(np.prod(shape)) * jnp.dtype(dtype).itemsize


# ---------------------------------------------------------------------------
# One-time parameter prep (hoisted out of the per-step / per-sequence path).
# ---------------------------------------------------------------------------
def prepare_lstm_params(W, b, *, in_dim, num_units, forget_bias=1.0,
                        matmul_dtype=jnp.float32):
    """Pad / split / cast the LSTM projection parameters once.

    * Gate (lane) axis padded to n_pad = round_up(num_units, 128) so the
      i/j/f/o slices of the projection sit on 128-lane vreg boundaries.
    * W row-split into W_x (input->gates) and W_h (hidden->gates): the kernel
      never materializes concat([x, h]).
    * W_h's row (contraction) axis zero-padded to n_pad so the lane-dense
      padded h carry feeds straight back into the matmul.
    * forget_bias folded into the f-gate bias columns.
    * Weights cast to `matmul_dtype` (e.g. bf16) once here — not per step in
      the kernel.  Bias and accumulation stay f32.
    """
    W = jnp.asarray(W, jnp.float32)
    b = jnp.asarray(b, jnp.float32)
    assert W.shape == (in_dim + num_units, 4 * num_units)
    assert b.shape == (4 * num_units,)

    n_pad = _round_up(num_units, 128)

    W4 = W.reshape(in_dim + num_units, 4, num_units)
    W4 = jnp.pad(W4, ((0, 0), (0, 0), (0, n_pad - num_units)))     # zero pad cols
    W_pad = W4.reshape(in_dim + num_units, 4 * n_pad)
    W_x = W_pad[:in_dim].astype(matmul_dtype)                      # (in_dim, 4*n_pad)
    W_h = jnp.pad(W_pad[in_dim:],
                  ((0, n_pad - num_units), (0, 0))).astype(matmul_dtype)  # (n_pad, 4*n_pad)

    b4 = b.reshape(4, num_units)
    b4 = b4.at[2].add(jnp.float32(forget_bias))   # fold forget_bias into f gate
    b_g = jnp.pad(b4, ((0, 0), (0, n_pad - num_units))).reshape(1, 4 * n_pad)

    return dict(W_x=W_x, W_h=W_h, b_g=b_g, n_pad=n_pad, in_dim=in_dim,
                num_units=num_units, matmul_dtype=matmul_dtype)


# ---------------------------------------------------------------------------
# Fused-sequence kernel: one grid step == one (batch_tile, timestep).
# ---------------------------------------------------------------------------
def lstm_seq_kernel(x_ref, h0_ref, c0_ref, wx_ref, wh_ref, b_ref,
                    hs_ref, c_ref, h_scr, *, matmul_dtype, gate_dtype):
    """x_ref  : (block_b, in_dim)        step input (matmul_dtype)
       h0_ref : (block_b, n_pad)         initial hidden (f32, lane padded)
       c0_ref : (block_b, n_pad)         initial cell   (f32, lane padded)
       wx_ref : (in_dim, 4*n_pad)        input->gates weights  (resident)
       wh_ref : (n_pad, 4*n_pad)         hidden->gates weights (resident)
       b_ref  : (1, 4*n_pad)             gate bias, forget_bias pre-folded
       hs_ref : (block_b, n_pad)         h_t output block (streams with t)
       c_ref  : (block_b, n_pad)         cell carry == grid-resident output
       h_scr  : (block_b, n_pad) VMEM    hidden carry scratch
    """
    n_pad = c_ref.shape[-1]
    t = pl.program_id(1)

    # New batch tile: load the initial recurrent state into the on-chip carries.
    @pl.when(t == 0)
    def _():
        h_scr[...] = h0_ref[...]
        c_ref[...] = c0_ref[...]

    x = x_ref[...]                               # already in matmul_dtype
    h_prev = h_scr[...].astype(matmul_dtype)

    # proj = [x, h_prev] @ W + b, without materializing the concat. f32 MXU acc.
    proj = (jnp.dot(x, wx_ref[...], preferred_element_type=jnp.float32)
            + jnp.dot(h_prev, wh_ref[...], preferred_element_type=jnp.float32)
            + b_ref[...])

    # 128-lane-aligned gate slices, torch.split order: i, j, f, o.
    i_g = proj[:, 0 * n_pad:1 * n_pad]
    j_g = proj[:, 1 * n_pad:2 * n_pad]
    f_g = proj[:, 2 * n_pad:3 * n_pad]
    o_g = proj[:, 3 * n_pad:4 * n_pad]

    # Gate nonlinearities optionally in bf16 (v6e/v7x EUP); cell state stays f32.
    ig = jax.nn.sigmoid(i_g.astype(gate_dtype)).astype(jnp.float32)
    fg = jax.nn.sigmoid(f_g.astype(gate_dtype)).astype(jnp.float32)
    og = jax.nn.sigmoid(o_g.astype(gate_dtype)).astype(jnp.float32)
    jg = jnp.tanh(j_g.astype(gate_dtype)).astype(jnp.float32)

    c_new = fg * c_ref[...] + ig * jg            # forget_bias already in bias
    h_new = og * jnp.tanh(c_new)

    c_ref[...] = c_new                           # cell carry (resident block)
    h_scr[...] = h_new                           # hidden carry (scratch)
    hs_ref[...] = h_new.astype(hs_ref.dtype)     # lane-dense 128-aligned store


def lstm_sequence(xs, h0, c0, params, *, block_b=None,
                  gate_dtype=jnp.float32, out_dtype=jnp.float32):
    """Run the whole LSTM recurrence in one pallas_call.

    xs: (T, B, in_dim); h0, c0: (B, num_units) — prepped `params` from
    prepare_lstm_params.  Returns (hs[(T,B,num_units)], (h_T, c_T)).
    """
    W_x, W_h, b_g = params["W_x"], params["W_h"], params["b_g"]
    n_pad = params["n_pad"]
    num_units = params["num_units"]
    in_dim = params["in_dim"]
    matmul_dtype = params["matmul_dtype"]

    T, B, xd = xs.shape
    assert xd == in_dim

    if block_b is None:
        # Fill the MXU rows (128 on v5e, 256 on v6e/v7x) when batch allows.
        block_b = min(_round_up(B, 8), 256)
    block_b = max(8, _round_up(block_b, 8))
    b_pad = _round_up(B, block_b)
    nb = b_pad // block_b

    # Pad batch (sublanes) and the recurrent-state lane axis once, up front.
    xs_p = jnp.pad(xs.astype(matmul_dtype), ((0, 0), (0, b_pad - B), (0, 0)))
    h_p = jnp.pad(h0.astype(jnp.float32),
                  ((0, b_pad - B), (0, n_pad - num_units)))
    c_p = jnp.pad(c0.astype(jnp.float32),
                  ((0, b_pad - B), (0, n_pad - num_units)))

    kernel = functools.partial(lstm_seq_kernel, matmul_dtype=matmul_dtype,
                               gate_dtype=gate_dtype)

    # Advisory cost estimate on the UNPADDED problem.
    flops = 2 * T * B * (in_dim + num_units) * 4 * num_units + 10 * T * B * num_units
    transc = 5 * T * B * num_units
    bytes_accessed = (_nbytes(xs_p.shape, xs_p.dtype)
                      + _nbytes(h_p.shape, h_p.dtype)
                      + _nbytes(c_p.shape, c_p.dtype)
                      + _nbytes(W_x.shape, W_x.dtype)
                      + _nbytes(W_h.shape, W_h.dtype)
                      + _nbytes(b_g.shape, b_g.dtype)
                      + _nbytes((T, b_pad, n_pad), out_dtype)
                      + _nbytes((b_pad, n_pad), jnp.float32))
    cost = pl.CostEstimate(flops=int(flops), transcendentals=int(transc),
                           bytes_accessed=int(bytes_accessed))

    # Weights / bias: constant block index over the whole grid -> fetched once,
    # kept VMEM-resident; single-buffered (never re-fetched, so double
    # buffering would only waste VMEM).
    wx_spec = pl.BlockSpec((in_dim, 4 * n_pad), lambda bb, t: (0, 0),
                           pipeline_mode=pl.Buffered(1))
    wh_spec = pl.BlockSpec((n_pad, 4 * n_pad), lambda bb, t: (0, 0),
                           pipeline_mode=pl.Buffered(1))
    b_spec = pl.BlockSpec((1, 4 * n_pad), lambda bb, t: (0, 0),
                          pipeline_mode=pl.Buffered(1))

    hs_p, c_last_p = pl.pallas_call(
        kernel,
        out_shape=(jax.ShapeDtypeStruct((T, b_pad, n_pad), out_dtype),
                   jax.ShapeDtypeStruct((b_pad, n_pad), jnp.float32)),
        grid_spec=pltpu.PrefetchScalarGridSpec(
            num_scalar_prefetch=0,
            grid=(nb, T),                                # batch outer, time inner
            in_specs=[
                pl.BlockSpec((None, block_b, in_dim), lambda bb, t: (t, bb, 0)),
                pl.BlockSpec((block_b, n_pad), lambda bb, t: (bb, 0)),   # h0
                pl.BlockSpec((block_b, n_pad), lambda bb, t: (bb, 0)),   # c0
                wx_spec, wh_spec, b_spec,
            ],
            out_specs=[
                pl.BlockSpec((None, block_b, n_pad), lambda bb, t: (t, bb, 0)),
                pl.BlockSpec((block_b, n_pad), lambda bb, t: (bb, 0)),   # c carry
            ],
            scratch_shapes=[pltpu.VMEM((block_b, n_pad), jnp.float32)],  # h carry
        ),
        compiler_params=pltpu.CompilerParams(
            # Batch tiles are independent (megacore / v7x 2 TCs); the time axis
            # carries the recurrence so it must be "arbitrary" and innermost.
            dimension_semantics=("parallel", "arbitrary")),
        cost_estimate=cost,
    )(xs_p, h_p, c_p, W_x, W_h, b_g)

    # Slice padded state back out ONCE, after the whole sequence.
    hs = hs_p[:, :B, :num_units]
    h_T = hs[-1]
    c_T = c_last_p[:B, :num_units]
    return hs, (h_T, c_T)


def lstm_cell(list_of_step_inputs, prev_h, prev_c, params, *,
              gate_dtype=jnp.float32):
    """Single-step LSTMCell.forward (input_mask=None, cell_dropout=None,
    output_dim=None).  Returns (final_out, (h, c)) with final_out == h.
    For whole sequences, call lstm_sequence directly (one fused pallas_call)."""
    if len(list_of_step_inputs) > 1:
        x = jnp.concatenate(list_of_step_inputs, axis=-1)
    else:
        x = list_of_step_inputs[0]
    hs, (h, c) = lstm_sequence(x[None], prev_h, prev_c, params,
                               gate_dtype=gate_dtype)
    h = hs[0]
    return h, (h, c)


# ---------------------------------------------------------------------------
# Pure-JAX reference (mirrors the PyTorch module) for verification.
# ---------------------------------------------------------------------------
def reference_step(x, h, c, W, b, *, num_units, forget_bias=1.0):
    proj = jnp.concatenate([x, h], axis=-1) @ W + b
    i, j, f, o = jnp.split(proj, 4, axis=-1)
    c_new = jax.nn.sigmoid(f + forget_bias) * c + jax.nn.sigmoid(i) * jnp.tanh(j)
    h_new = jax.nn.sigmoid(o) * jnp.tanh(c_new)
    return h_new, c_new


def reference_sequence(xs, h0, c0, W, b, *, num_units, forget_bias=1.0):
    def step(carry, x):
        h, c = carry
        h2, c2 = reference_step(x, h, c, W, b, num_units=num_units,
                                forget_bias=forget_bias)
        return (h2, c2), h2
    (hT, cT), hs = jax.lax.scan(step, (h0, c0), xs)
    return hs, (hT, cT)


if __name__ == "__main__":
    # Small shapes consistent with the module's forward.
    B = 2            # batch
    step_dim = 6     # list_of_input_dims = [6]
    num_units = 32
    T = 8            # sequence length for the fused-recurrence path
    forget_bias = 1.0

    key = jax.random.PRNGKey(0)
    keys = jax.random.split(key, 5)

    in_total = step_dim + num_units   # Linear input = concat(step, prev_h)
    # Deterministic synthetic init (truncated-normal-ish scale 0.075; zero bias)
    W = 0.075 * jax.random.normal(keys[0], (in_total, 4 * num_units), jnp.float32)
    b = jnp.zeros((4 * num_units,), jnp.float32)

    xs = jax.random.normal(keys[1], (T, B, step_dim), jnp.float32)
    h0 = 0.1 * jax.random.normal(keys[2], (B, num_units), jnp.float32)
    c0 = 0.1 * jax.random.normal(keys[3], (B, num_units), jnp.float32)

    # ------------------------------------------------------------------ f32 --
    params_f32 = prepare_lstm_params(W, b, in_dim=step_dim, num_units=num_units,
                                     forget_bias=forget_bias,
                                     matmul_dtype=jnp.float32)

    hs, (hT, cT) = lstm_sequence(xs, h0, c0, params_f32)
    jax.block_until_ready((hs, hT, cT))

    hs_r, (hT_r, cT_r) = reference_sequence(xs, h0, c0, W, b,
                                            num_units=num_units,
                                            forget_bias=forget_bias)
    assert jnp.allclose(hs, hs_r, rtol=1e-5, atol=1e-5)
    assert jnp.allclose(hT, hT_r, rtol=1e-5, atol=1e-5)
    assert jnp.allclose(cT, cT_r, rtol=1e-5, atol=1e-5)

    # Single-step module-forward API.
    out1, (h1, c1) = lstm_cell([xs[0]], h0, c0, params_f32)
    jax.block_until_ready((out1, h1, c1))
    h1_r, c1_r = reference_step(xs[0], h0, c0, W, b, num_units=num_units,
                                forget_bias=forget_bias)
    assert jnp.allclose(out1, h1_r, rtol=1e-5, atol=1e-5)
    assert jnp.allclose(h1, h1_r, rtol=1e-5, atol=1e-5)
    assert jnp.allclose(c1, c1_r, rtol=1e-5, atol=1e-5)

    # ------------------------------------ bf16 MXU + bf16 gate math (v6e/v7x) --
    params_bf16 = prepare_lstm_params(W, b, in_dim=step_dim, num_units=num_units,
                                      forget_bias=forget_bias,
                                      matmul_dtype=jnp.bfloat16)
    hs_b, (hT_b, cT_b) = lstm_sequence(xs, h0, c0, params_bf16,
                                       gate_dtype=jnp.bfloat16)
    jax.block_until_ready((hs_b, hT_b, cT_b))
    assert jnp.allclose(hs_b, hs_r, rtol=3e-2, atol=3e-2)
    assert jnp.allclose(cT_b, cT_r, rtol=3e-2, atol=3e-2)

    print("KERNEL_OK")
</pallas_src>

<mosaic_0001>
module attributes {stable_mosaic.version = 11 : i64} {
  func.func @lstm_seq_kernel(%arg0: i32, %arg1: i32, %arg2: memref<1x8x6xf32, #tpu.memory_space<vmem>>, %arg3: memref<8x128xf32, #tpu.memory_space<vmem>>, %arg4: memref<8x128xf32, #tpu.memory_space<vmem>>, %arg5: memref<6x512xf32, #tpu.memory_space<vmem>>, %arg6: memref<128x512xf32, #tpu.memory_space<vmem>>, %arg7: memref<1x512xf32, #tpu.memory_space<vmem>>, %arg8: memref<1x8x128xf32, #tpu.memory_space<vmem>>, %arg9: memref<8x128xf32, #tpu.memory_space<vmem>>, %arg10: memref<8x128xf32, #tpu.memory_space<vmem>>) attributes {dimension_semantics = [#tpu.dimension_semantics<parallel>, #tpu.dimension_semantics<arbitrary>], iteration_bounds = array<i64: 1, 8>, scalar_prefetch = 0 : i64, scratch_operands = 1 : i64, tpu.core_type = #tpu.core_type<tc>, window_params = [{transform_indices = @transform_0, window_bounds = array<i64: 1, 8, 6>}, {transform_indices = @transform_1, window_bounds = array<i64: 8, 128>}, {transform_indices = @transform_2, window_bounds = array<i64: 8, 128>}, {pipeline_mode = #tpu.pipeline_mode<synchronous>, transform_indices = @transform_3, window_bounds = array<i64: 6, 512>}, {pipeline_mode = #tpu.pipeline_mode<synchronous>, transform_indices = @transform_4, window_bounds = array<i64: 128, 512>}, {pipeline_mode = #tpu.pipeline_mode<synchronous>, transform_indices = @transform_5, window_bounds = array<i64: 1, 512>}, {transform_indices = @transform_6, window_bounds = array<i64: 1, 8, 128>}, {transform_indices = @transform_7, window_bounds = array<i64: 8, 128>}]} {
    %c0_i32 = arith.constant 0 : i32
    %0 = arith.cmpi eq, %arg1, %c0_i32 : i32
    %1 = arith.extui %0 : i1 to i32
    %c0_i32_0 = arith.constant 0 : i32
    %2 = arith.cmpi ne, %1, %c0_i32_0 : i32
    scf.if %2 {
      %c0_24 = arith.constant 0 : index
      %c0_25 = arith.constant 0 : index
      %45 = vector.load %arg3[%c0_24, %c0_25] : memref<8x128xf32, #tpu.memory_space<vmem>>, vector<8x128xf32>
      %c0_26 = arith.constant 0 : index
      %c0_27 = arith.constant 0 : index
      %46 = vector.load %arg10[%c0_26, %c0_27] : memref<8x128xf32, #tpu.memory_space<vmem>>, vector<8x128xf32>
      tpu.vector_store %arg10[%c0_26, %c0_27], %45 {strides = array<i32>} : memref<8x128xf32, #tpu.memory_space<vmem>>, vector<8x128xf32>,
      %c0_28 = arith.constant 0 : index
      %c0_29 = arith.constant 0 : index
      %47 = vector.load %arg4[%c0_28, %c0_29] : memref<8x128xf32, #tpu.memory_space<vmem>>, vector<8x128xf32>
      %c0_30 = arith.constant 0 : index
      %c0_31 = arith.constant 0 : index
      %48 = vector.load %arg9[%c0_30, %c0_31] : memref<8x128xf32, #tpu.memory_space<vmem>>, vector<8x128xf32>
      tpu.vector_store %arg9[%c0_30, %c0_31], %47 {strides = array<i32>} : memref<8x128xf32, #tpu.memory_space<vmem>>, vector<8x128xf32>,
    } else {
    }
    %c0 = arith.constant 0 : index
    %c0_1 = arith.constant 0 : index
    %c0_2 = arith.constant 0 : index
    %3 = vector.load %arg2[%c0, %c0_1, %c0_2] : memref<1x8x6xf32, #tpu.memory_space<vmem>>, vector<1x8x6xf32>
    %4 = vector.shape_cast %3 : vector<1x8x6xf32> to vector<8x6xf32>
    %c0_3 = arith.constant 0 : index
    %c0_4 = arith.constant 0 : index
    %5 = vector.load %arg10[%c0_3, %c0_4] : memref<8x128xf32, #tpu.memory_space<vmem>>, vector<8x128xf32>
    %c0_5 = arith.constant 0 : index
    %c0_6 = arith.constant 0 : index
    %6 = vector.load %arg5[%c0_5, %c0_6] : memref<6x512xf32, #tpu.memory_space<vmem>>, vector<6x512xf32>
    %cst = arith.constant dense<0.000000e+00> : vector<8x512xf32>
    %7 = tpu.matmul %4, %6, %cst {dimension_numbers = #tpu.dot_dimension_numbers<[1], [0], [0], [1], [0, 0, 1, 1], [], []>} : vector<8x6xf32>, vector<6x512xf32>, vector<8x512xf32> -> vector<8x512xf32>
    %c0_7 = arith.constant 0 : index
    %c0_8 = arith.constant 0 : index
    %8 = vector.load %arg6[%c0_7, %c0_8] : memref<128x512xf32, #tpu.memory_space<vmem>>, vector<128x512xf32>
    %cst_9 = arith.constant dense<0.000000e+00> : vector<8x512xf32>
    %9 = tpu.matmul %5, %8, %cst_9 {dimension_numbers = #tpu.dot_dimension_numbers<[1], [0], [0], [1], [0, 0, 1, 1], [], []>} : vector<8x128xf32>, vector<128x512xf32>, vector<8x512xf32> -> vector<8x512xf32>
    %10 = arith.addf %7, %9 : vector<8x512xf32>
    %c0_10 = arith.constant 0 : index
    %c0_11 = arith.constant 0 : index
    %11 = vector.load %arg7[%c0_10, %c0_11] : memref<1x512xf32, #tpu.memory_space<vmem>>, vector<1x512xf32>
    %12 = vector.broadcast %11 : vector<1x512xf32> to vector<8x512xf32>
    %13 = arith.addf %10, %12 : vector<8x512xf32>
    %14 = vector.extract_strided_slice %13 {offsets = [0, 0], sizes = [8, 128], strides = [1, 1]} : vector<8x512xf32> to vector<8x128xf32>
    %15 = vector.extract_strided_slice %13 {offsets = [0, 128], sizes = [8, 128], strides = [1, 1]} : vector<8x512xf32> to vector<8x128xf32>
    %16 = vector.extract_strided_slice %13 {offsets = [0, 256], sizes = [8, 128], strides = [1, 1]} : vector<8x512xf32> to vector<8x128xf32>
    %17 = vector.extract_strided_slice %13 {offsets = [0, 384], sizes = [8, 128], strides = [1, 1]} : vector<8x512xf32> to vector<8x128xf32>
    %18 = arith.negf %14 : vector<8x128xf32>
    %19 = math.exp %18 : vector<8x128xf32>
    %cst_12 = arith.constant 1.000000e+00 : f32
    %20 = vector.broadcast %cst_12 : f32 to vector<8x128xf32>
    %21 = arith.addf %20, %19 : vector<8x128xf32>
    %22 = arith.divf %20, %21 : vector<8x128xf32>
    %23 = arith.negf %16 : vector<8x128xf32>
    %24 = math.exp %23 : vector<8x128xf32>
    %cst_13 = arith.constant 1.000000e+00 : f32
    %25 = vector.broadcast %cst_13 : f32 to vector<8x128xf32>
    %26 = arith.addf %25, %24 : vector<8x128xf32>
    %27 = arith.divf %25, %26 : vector<8x128xf32>
    %28 = arith.negf %17 : vector<8x128xf32>
    %29 = math.exp %28 : vector<8x128xf32>
    %cst_14 = arith.constant 1.000000e+00 : f32
    %30 = vector.broadcast %cst_14 : f32 to vector<8x128xf32>
    %31 = arith.addf %30, %29 : vector<8x128xf32>
    %32 = arith.divf %30, %31 : vector<8x128xf32>
    %33 = math.tanh %15 : vector<8x128xf32>
    %c0_15 = arith.constant 0 : index
    %c0_16 = arith.constant 0 : index
    %34 = vector.load %arg9[%c0_15, %c0_16] : memref<8x128xf32, #tpu.memory_space<vmem>>, vector<8x128xf32>
    %35 = arith.mulf %27, %34 : vector<8x128xf32>
    %36 = arith.mulf %22, %33 : vector<8x128xf32>
    %37 = arith.addf %35, %36 : vector<8x128xf32>
    %38 = math.tanh %37 : vector<8x128xf32>
    %39 = arith.mulf %32, %38 : vector<8x128xf32>
    %c0_17 = arith.constant 0 : index
    %c0_18 = arith.constant 0 : index
    %40 = vector.load %arg9[%c0_17, %c0_18] : memref<8x128xf32, #tpu.memory_space<vmem>>, vector<8x128xf32>
    tpu.vector_store %arg9[%c0_17, %c0_18], %37 {strides = array<i32>} : memref<8x128xf32, #tpu.memory_space<vmem>>, vector<8x128xf32>,
    %c0_19 = arith.constant 0 : index
    %c0_20 = arith.constant 0 : index
    %41 = vector.load %arg10[%c0_19, %c0_20] : memref<8x128xf32, #tpu.memory_space<vmem>>, vector<8x128xf32>
    tpu.vector_store %arg10[%c0_19, %c0_20], %39 {strides = array<i32>} : memref<8x128xf32, #tpu.memory_space<vmem>>, vector<8x128xf32>,
    %c0_21 = arith.constant 0 : index
    %c0_22 = arith.constant 0 : index
    %c0_23 = arith.constant 0 : index
    %42 = vector.load %arg8[%c0_21, %c0_22, %c0_23] : memref<1x8x128xf32, #tpu.memory_space<vmem>>, vector<1x8x128xf32>
    %43 = vector.shape_cast %42 : vector<1x8x128xf32> to vector<8x128xf32>
    %44 = vector.shape_cast %39 : vector<8x128xf32> to vector<1x8x128xf32>
    tpu.vector_store %arg8[%c0_21, %c0_22, %c0_23], %44 {strides = array<i32>} : memref<1x8x128xf32, #tpu.memory_space<vmem>>, vector<1x8x128xf32>,
    return
  }
  func.func @transform_0(%arg0: i32, %arg1: i32) -> (i32, i32, i32) {
    %c0_i32 = arith.constant 0 : i32
    %c0_i32_0 = arith.constant 0 : i32
    return %arg1, %arg0, %c0_i32 : i32, i32, i32
  }
  func.func @transform_1(%arg0: i32, %arg1: i32) -> (i32, i32) {
    %c0_i32 = arith.constant 0 : i32
    %c0_i32_0 = arith.constant 0 : i32
    return %arg0, %c0_i32 : i32, i32
  }
  func.func @transform_2(%arg0: i32, %arg1: i32) -> (i32, i32) {
    %c0_i32 = arith.constant 0 : i32
    %c0_i32_0 = arith.constant 0 : i32
    return %arg0, %c0_i32 : i32, i32
  }
  func.func @transform_3(%arg0: i32, %arg1: i32) -> (i32, i32) {
    %c0_i32 = arith.constant 0 : i32
    %c0_i32_0 = arith.constant 0 : i32
    %c0_i32_1 = arith.constant 0 : i32
    return %c0_i32, %c0_i32_0 : i32, i32
  }
  func.func @transform_4(%arg0: i32, %arg1: i32) -> (i32, i32) {
    %c0_i32 = arith.constant 0 : i32
    %c0_i32_0 = arith.constant 0 : i32
    %c0_i32_1 = arith.constant 0 : i32
    return %c0_i32, %c0_i32_0 : i32, i32
  }
  func.func @transform_5(%arg0: i32, %arg1: i32) -> (i32, i32) {
    %c0_i32 = arith.constant 0 : i32
    %c0_i32_0 = arith.constant 0 : i32
    %c0_i32_1 = arith.constant 0 : i32
    return %c0_i32, %c0_i32_0 : i32, i32
  }
  func.func @transform_6(%arg0: i32, %arg1: i32) -> (i32, i32, i32) {
    %c0_i32 = arith.constant 0 : i32
    %c0_i32_0 = arith.constant 0 : i32
    return %arg1, %arg0, %c0_i32 : i32, i32, i32
  }
  func.func @transform_7(%arg0: i32, %arg1: i32) -> (i32, i32) {
    %c0_i32 = arith.constant 0 : i32
    %c0_i32_0 = arith.constant 0 : i32
    return %arg0, %c0_i32 : i32, i32
  }
}

</mosaic_0001>

<llo_original>
// kernel: tpu_custom_call.1
$region0: #{tpu_custom_call.1}
  #allocation0 [shape = 'u32[]', space=smem, size = 0x4, offset = 0x4, fixed_abs, tag = 'smem constant byte address 0x4 - core index']
  #allocation1 [shape = 'u32[144,128]{1,0:T(1,128)}', space=vmem, size = 0x12000, scoped, tag = 'internal scratch']
  #allocation2 [shape = 'f32[8,128]{1,0:T(8,128)}', space=vmem, size = 0x1000, scoped, tag = 'scratch operand']
  %s0 = inlined_call_operand.vmem [shape: f32[8,8,6], index: 0, kind: input, shape index: {}]
  %s1 = inlined_call_operand.vmem [shape: f32[8,128], index: 1, kind: input, shape index: {}]
  %s2 = inlined_call_operand.vmem [shape: f32[8,128], index: 2, kind: input, shape index: {}]
  %s3 = inlined_call_operand.vmem [shape: f32[6,512], index: 3, kind: input, shape index: {}]
  %s4 = inlined_call_operand.hbm [shape: f32[128,512], index: 4, kind: input, shape index: {}]
  %s5 = inlined_call_operand.vmem [shape: f32[1,512], index: 5, kind: input, shape index: {}]
  %s6 = inlined_call_operand.hbm [shape: f32[8,8,128], index: 6, kind: output, shape index: {0}]
  %s7 = inlined_call_operand.hbm [shape: f32[8,128], index: 7, kind: output, shape index: {1}]
  %8 = xla_tuple %s6, %s7
  %s9 = sld [smem:[#allocation0]]
  $region73: #{tpu_custom_call.1} parent=0
    _
  %s11 = ssub.s32 1, %s9
  %s12 = scalar_select 0, %s11, %s9
  $region1: #{tpu_custom_call.1} parent=0
    #allocation3 [shape = 'u8[262144]{0}', space=vmem, size = 0x40000, scoped, tag = 'input window, operand 4, single buffered']
    #allocation4 [shape = 's32[2]{0}', space=sflag, size = 0x8, scoped, tag = 'scoped memory for tpu_custom_call.1']
    #allocation5 [shape = 's32[2]{0}', space=sflag, size = 0x8, scoped, tag = 'scoped memory for tpu_custom_call.1']
    #allocation6 [shape = 'u8[8192]{0}', space=vmem, size = 0x2000, scoped, tag = 'output window, operand 0']
    #allocation7 [shape = 'u8[4096]{0}', space=vmem, size = 0x1000, scoped, tag = 'output window, operand 1, single buffered']
    #allocation8 [shape = 's32[1]{0}', space=sflag, size = 0x4, scoped, tag = 'scoped memory for tpu_custom_call.1']
    %13 = vsyncpa [#allocation4], 0
    %14 = vsyncpa [#allocation5], 0
    %s15 = scalar_lea.sflag [#allocation5], 1
    %16 = vsyncpa %s15, 0
    %17 = vsyncpa [#allocation8], 0
    loop: start=0, step=1, limit=10
    $region2: #{tpu_custom_call.1} parent=1 // loop_pre_header
      _
    $region3: #{tpu_custom_call.1} parent=1 // loop_header
      %s19 = sphi 0, %s23
      %p20 = scmp.ge.s32.totalorder %s19, 10
      %s26 = sphi 0, %s38
      %s27 = sphi 0, %s34
      %s28 = sphi 0, %s26
      %s29 = sphi 0, %s27
      %s30 = sphi 0, %s28
      %s31 = sphi 0, %s29
      %s43 = sphi 0, %s45
      %s46 = sphi 0, %s43
      %s47 = sphi 0, %s46
      %s63 = sphi 0, %s47
      %s69 = sphi 0, %s71
      %s72 = sphi 0, %s69
      %s73 = sphi 0, %s72
      %s89 = sphi 0, %s73
      %s95 = sphi 0, %s97
      %s98 = sphi 0, %s95
      %s99 = sphi 0, %s98
      %s115 = sphi 0, %s99
      %s119 = sphi 0, %s119
      %s121 = sphi 0, %s119
      %s122 = sphi 0, %s121
      %s136 = sphi 0, %s122
      %s140 = sphi 0, %s140
      %s142 = sphi 0, %s140
      %s143 = sphi 0, %s142
      %s157 = sphi 0, %s143
      %s161 = sphi 0, %s161
      %s163 = sphi 0, %s161
      %s164 = sphi 0, %s163
      %s178 = sphi 0, %s164
      %s186 = sphi 0, %s188
      %s189 = sphi 0, %s186
      %s190 = sphi 0, %s189
      %s206 = sphi 0, %s190
      %s212 = sphi 0, %s214
      %s215 = sphi 0, %s212
      %s216 = sphi 0, %s215
      %s232 = sphi 0, %s216
    $region4: #{tpu_custom_call.1} parent=1 // loop_header_branch
      %22 = sbr.rel (%p20) target = $region8
    $region5: #{tpu_custom_call.1} parent=1 // loop_body
      %s24 = ssub.s32 %s19, 1
      %s25 = ssub.s32 %s19, 2
      %s32 = sadd.s32 1, %s27
      %p33 = scmp.ge.s32.totalorder %s32, 8
      %s34 = scalar_select %p33, 0, %s32
      %s35 = sadd.s32 1, %s26
      %s36 = scalar_select %p33, %s35, %s26
      %p37 = scmp.ge.s32.totalorder %s36, 1
      %s38 = scalar_select %p37, 0, %s36
      %s39 = ssub.s32 %s27, %s34
      %s40 = ssub.s32 %s26, %s38
      %s41 = sor.u32 %s39, %s40
      %p42 = scmp.eq.s32.totalorder %s41, 0
      %s44 = sadd.s32 %s43, 1
      %s45 = scalar_select %p42, %s43, %s44
      %p48 = pneg %p42
      %p49 = scmp.eq.s32.totalorder %s19, 7
      %p50 = por %p48, %p49
      %p51 = scmp.ne.s32.totalorder %s43, %s46
      %p52 = scmp.eq.s32.totalorder %s19, 0
      %p53 = por %p51, %p52
      %p54 = scmp.ne.s32.totalorder %s43, %s46
      %p55 = scmp.eq.s32.totalorder %s24, 7
      %p56 = por %p54, %p55
      %p57 = scmp.ne.s32.totalorder %s46, %s47
      %p58 = scmp.eq.s32.totalorder %s24, 0
      %p59 = por %p57, %p58
      %p60 = scmp.ne.s32.totalorder %s46, %s47
      %p61 = scmp.eq.s32.totalorder %s25, 7
      %p62 = por %p60, %p61
      %p64 = scmp.ne.s32.totalorder %s47, %s63
      %p65 = scmp.eq.s32.totalorder %s25, 0
      %p66 = por %p64, %p65
      %s67 = ssub.s32 %s26, %s38
      %p68 = scmp.eq.s32.totalorder %s67, 0
      %s70 = sadd.s32 %s69, 1
      %s71 = scalar_select %p68, %s69, %s70
      %p74 = pneg %p68
      %p75 = scmp.eq.s32.totalorder %s19, 7
      %p76 = por %p74, %p75
      %p77 = scmp.ne.s32.totalorder %s69, %s72
      %p78 = scmp.eq.s32.totalorder %s19, 0
      %p79 = por %p77, %p78
      %p80 = scmp.ne.s32.totalorder %s69, %s72
      %p81 = scmp.eq.s32.totalorder %s24, 7
      %p82 = por %p80, %p81
      %p83 = scmp.ne.s32.totalorder %s72, %s73
      %p84 = scmp.eq.s32.totalorder %s24, 0
      %p85 = por %p83, %p84
      %p86 = scmp.ne.s32.totalorder %s72, %s73
      %p87 = scmp.eq.s32.totalorder %s25, 7
      %p88 = por %p86, %p87
      %p90 = scmp.ne.s32.totalorder %s73, %s89
      %p91 = scmp.eq.s32.totalorder %s25, 0
      %p92 = por %p90, %p91
      %s93 = ssub.s32 %s26, %s38
      %p94 = scmp.eq.s32.totalorder %s93, 0
      %s96 = sadd.s32 %s95, 1
      %s97 = scalar_select %p94, %s95, %s96
      %p100 = pneg %p94
      %p101 = scmp.eq.s32.totalorder %s19, 7
      %p102 = por %p100, %p101
      %p103 = scmp.ne.s32.totalorder %s95, %s98
      %p104 = scmp.eq.s32.totalorder %s19, 0
      %p105 = por %p103, %p104
      %p106 = scmp.ne.s32.totalorder %s95, %s98
      %p107 = scmp.eq.s32.totalorder %s24, 7
      %p108 = por %p106, %p107
      %p109 = scmp.ne.s32.totalorder %s98, %s99
      %p110 = scmp.eq.s32.totalorder %s24, 0
      %p111 = por %p109, %p110
      %p112 = scmp.ne.s32.totalorder %s98, %s99
      %p113 = scmp.eq.s32.totalorder %s25, 7
      %p114 = por %p112, %p113
      %p116 = scmp.ne.s32.totalorder %s99, %s115
      %p117 = scmp.eq.s32.totalorder %s25, 0
      %p118 = por %p116, %p117
      %s120 = sadd.s32 %s119, 1
      %p123 = scmp.eq.s32.totalorder %s19, 7
      %p124 = scmp.ne.s32.totalorder %s119, %s121
      %p125 = scmp.eq.s32.totalorder %s19, 0
      %p126 = por %p124, %p125
      %p127 = scmp.ne.s32.totalorder %s119, %s121
      %p128 = scmp.eq.s32.totalorder %s24, 7
      %p129 = por %p127, %p128
      %p130 = scmp.ne.s32.totalorder %s121, %s122
      %p131 = scmp.eq.s32.totalorder %s24, 0
      %p132 = por %p130, %p131
      %p133 = scmp.ne.s32.totalorder %s121, %s122
      %p134 = scmp.eq.s32.totalorder %s25, 7
      %p135 = por %p133, %p134
      %p137 = scmp.ne.s32.totalorder %s122, %s136
      %p138 = scmp.eq.s32.totalorder %s25, 0
      %p139 = por %p137, %p138
      %s141 = sadd.s32 %s140, 1
      %p144 = scmp.eq.s32.totalorder %s19, 7
      %p145 = scmp.ne.s32.totalorder %s140, %s142
      %p146 = scmp.eq.s32.totalorder %s19, 0
      %p147 = por %p145, %p146
      %p148 = scmp.ne.s32.totalorder %s140, %s142
      %p149 = scmp.eq.s32.totalorder %s24, 7
      %p150 = por %p148, %p149
      %p151 = scmp.ne.s32.totalorder %s142, %s143
      %p152 = scmp.eq.s32.totalorder %s24, 0
      %p153 = por %p151, %p152
      %p154 = scmp.ne.s32.totalorder %s142, %s143
      %p155 = scmp.eq.s32.totalorder %s25, 7
      %p156 = por %p154, %p155
      %p158 = scmp.ne.s32.totalorder %s143, %s157
      %p159 = scmp.eq.s32.totalorder %s25, 0
      %p160 = por %p158, %p159
      %s162 = sadd.s32 %s161, 1
      %p165 = scmp.eq.s32.totalorder %s19, 7
      %p166 = scmp.ne.s32.totalorder %s161, %s163
      %p167 = scmp.eq.s32.totalorder %s19, 0
      %p168 = por %p166, %p167
      %p169 = scmp.ne.s32.totalorder %s161, %s163
      %p170 = scmp.eq.s32.totalorder %s24, 7
      %p171 = por %p169, %p170
      %p172 = scmp.ne.s32.totalorder %s163, %s164
      %p173 = scmp.eq.s32.totalorder %s24, 0
      %p174 = por %p172, %p173
      %p175 = scmp.ne.s32.totalorder %s163, %s164
      %p176 = scmp.eq.s32.totalorder %s25, 7
      %p177 = por %p175, %p176
      %p179 = scmp.ne.s32.totalorder %s164, %s178
      %p180 = scmp.eq.s32.totalorder %s25, 0
      %p181 = por %p179, %p180
      %s182 = ssub.s32 %s27, %s34
      %s183 = ssub.s32 %s26, %s38
      %s184 = sor.u32 %s182, %s183
      %p185 = scmp.eq.s32.totalorder %s184, 0
      %s187 = sadd.s32 %s186, 1
      %s188 = scalar_select %p185, %s186, %s187
      %p191 = pneg %p185
      %p192 = scmp.eq.s32.totalorder %s19, 7
      %p193 = por %p191, %p192
      %p194 = scmp.ne.s32.totalorder %s186, %s189
      %p195 = scmp.eq.s32.totalorder %s19, 0
      %p196 = por %p194, %p195
      %p197 = scmp.ne.s32.totalorder %s186, %s189
      %p198 = scmp.eq.s32.totalorder %s24, 7
      %p199 = por %p197, %p198
      %p200 = scmp.ne.s32.totalorder %s189, %s190
      %p201 = scmp.eq.s32.totalorder %s24, 0
      %p202 = por %p200, %p201
      %p203 = scmp.ne.s32.totalorder %s189, %s190
      %p204 = scmp.eq.s32.totalorder %s25, 7
      %p205 = por %p203, %p204
      %p207 = scmp.ne.s32.totalorder %s190, %s206
      %p208 = scmp.eq.s32.totalorder %s25, 0
      %p209 = por %p207, %p208
      %s210 = ssub.s32 %s26, %s38
      %p211 = scmp.eq.s32.totalorder %s210, 0
      %s213 = sadd.s32 %s212, 1
      %s214 = scalar_select %p211, %s212, %s213
      %p217 = pneg %p211
      %p218 = scmp.eq.s32.totalorder %s19, 7
      %p219 = por %p217, %p218
      %p220 = scmp.ne.s32.totalorder %s212, %s215
      %p221 = scmp.eq.s32.totalorder %s19, 0
      %p222 = por %p220, %p221
      %p223 = scmp.ne.s32.totalorder %s212, %s215
      %p224 = scmp.eq.s32.totalorder %s24, 7
      %p225 = por %p223, %p224
      %p226 = scmp.ne.s32.totalorder %s215, %s216
      %p227 = scmp.eq.s32.totalorder %s24, 0
      %p228 = por %p226, %p227
      %p229 = scmp.ne.s32.totalorder %s215, %s216
      %p230 = scmp.eq.s32.totalorder %s25, 7
      %p231 = por %p229, %p230
      %p233 = scmp.ne.s32.totalorder %s216, %s232
      %p234 = scmp.eq.s32.totalorder %s25, 0
      %p235 = por %p233, %p234
      %p236 = scmp.le.s32.totalorder 1, %s19
      %p237 = scmp.lt.s32.totalorder %s19, 9
      %p238 = pnand %p236, %p237
      %p239 = pneg %p238
      // Predicated region
      $region9: #{tpu_custom_call.1} parent=5 // pred_check
        _
      $region10: #{tpu_custom_call.1} parent=5 // pred_check_branch
        %241 = sbr.rel (%p238) target = $region12
      $region11: #{tpu_custom_call.1} parent=5 // pred_region
        %s242 = ssub.s32 %s19, 1
        // Predicated region
        $region13: #{tpu_custom_call.1} parent=11 // pred_check
          %p243 = pneg %p85
        $region14: #{tpu_custom_call.1} parent=11 // pred_check_branch
          %245 = sbr.rel (%p243) target = $region16
        $region15: #{tpu_custom_call.1} parent=11 // pred_region
          %p246 = scmp.lt.s32.totalorder %s28, 0
          %s247 = scalar_select %p246, %s28, 0
          %s248 = smul.addr %s247, 8
          %s249 = scalar_lea.vmem %s1, %s248
        $region16: #{tpu_custom_call.1} parent=11 // pred_fallthru
          _
        // Predicated region
        $region17: #{tpu_custom_call.1} parent=11 // pred_check
          %p250 = pneg %p111
        $region18: #{tpu_custom_call.1} parent=11 // pred_check_branch
          %252 = sbr.rel (%p250) target = $region20
        $region19: #{tpu_custom_call.1} parent=11 // pred_region
          %p253 = scmp.lt.s32.totalorder %s28, 0
          %s254 = scalar_select %p253, %s28, 0
          %s255 = smul.addr %s254, 8
          %s256 = scalar_lea.vmem %s2, %s255
        $region20: #{tpu_custom_call.1} parent=11 // pred_fallthru
          _
        // Predicated region
        $region21: #{tpu_custom_call.1} parent=11 // pred_check
          %p257 = pneg %p132
        $region22: #{tpu_custom_call.1} parent=11 // pred_check_branch
          %259 = sbr.rel (%p257) target = $region24
        $region23: #{tpu_custom_call.1} parent=11 // pred_region
          _
        $region24: #{tpu_custom_call.1} parent=11 // pred_fallthru
          _
        // Predicated region
        $region25: #{tpu_custom_call.1} parent=11 // pred_check
          %p260 = pneg %p153
        $region26: #{tpu_custom_call.1} parent=11 // pred_check_branch
          %262 = sbr.rel (%p260) target = $region28
        $region27: #{tpu_custom_call.1} parent=11 // pred_region
          %s264 = ssub.s32 8192, 8192
          %265 = vsyncadd [#allocation4], %s264
          %s266 = sshll.u32 [#allocation3], 4
          %s267 = int_to_ptr.vmem [resolvable:$true] %s266
          %272 = dma.hbm_to_vmem [thread:$0]  %s4, 8192, %s267, [#allocation4], 512, 512, 32
        $region28: #{tpu_custom_call.1} parent=11 // pred_fallthru
          _
        // Predicated region
        $region29: #{tpu_custom_call.1} parent=11 // pred_check
          %p273 = pneg %p174
        $region30: #{tpu_custom_call.1} parent=11 // pred_check_branch
          %275 = sbr.rel (%p273) target = $region32
        $region31: #{tpu_custom_call.1} parent=11 // pred_region
          _
        $region32: #{tpu_custom_call.1} parent=11 // pred_fallthru
          _
      $region12: #{tpu_custom_call.1} parent=5 // pred_fallthru
        _
      %p276 = scmp.lt.s32.totalorder %s19, 8
      // Predicated region
      $region33: #{tpu_custom_call.1} parent=5 // pred_check
        %p277 = pneg %p276
      $region34: #{tpu_custom_call.1} parent=5 // pred_check_branch
        %279 = sbr.rel (%p277) target = $region36
      $region35: #{tpu_custom_call.1} parent=5 // pred_region
        // Predicated region
        $region37: #{tpu_custom_call.1} parent=35 // pred_check
          %p280 = pneg %p53
        $region38: #{tpu_custom_call.1} parent=35 // pred_check_branch
          %282 = sbr.rel (%p280) target = $region40
        $region39: #{tpu_custom_call.1} parent=35 // pred_region
          %p283 = scmp.lt.s32.totalorder %s27, 7
          %s284 = scalar_select %p283, %s27, 7
          %p285 = scmp.lt.s32.totalorder %s26, 0
          %s286 = scalar_select %p285, %s26, 0
          %s287 = sadd.s32 %s286, %s284
          %s288 = smul.addr %s287, 8
          %s289 = scalar_lea.vmem %s0, %s288
        $region40: #{tpu_custom_call.1} parent=35 // pred_fallthru
          _
      $region36: #{tpu_custom_call.1} parent=5 // pred_fallthru
        _
      %p290 = scmp.le.s32.totalorder 1, %s19
      %p291 = scmp.lt.s32.totalorder %s19, 9
      %p292 = pnand %p290, %p291
      %p293 = pneg %p292
      // Predicated region
      $region41: #{tpu_custom_call.1} parent=5 // pred_check
        _
      $region42: #{tpu_custom_call.1} parent=5 // pred_check_branch
        %295 = sbr.rel (%p292) target = $region44
      $region43: #{tpu_custom_call.1} parent=5 // pred_region
        %s296 = ssub.s32 %s19, 1
        // Predicated region
        $region45: #{tpu_custom_call.1} parent=43 // pred_check
          %p297 = pneg %p153
        $region46: #{tpu_custom_call.1} parent=43 // pred_check_branch
          %299 = sbr.rel (%p297) target = $region48
        $region47: #{tpu_custom_call.1} parent=43 // pred_region
          %300 = dma.done [#allocation4], 8192
        $region48: #{tpu_custom_call.1} parent=43 // pred_fallthru
          _
        %p301 = scmp.lt.s32.totalorder %s29, 7
        %s302 = scalar_select %p301, %s29, 7
        %p303 = scmp.lt.s32.totalorder %s28, 0
        %s304 = scalar_select %p303, %s28, 0
        %s305 = sadd.s32 %s304, %s302
        %s306 = smul.addr %s305, 8
        %s307 = scalar_lea.vmem %s0, %s306
        %p308 = pneg %p59
        %p309 = pneg %p56
        %p310 = scmp.lt.s32.totalorder %s28, 0
        %s311 = scalar_select %p310, %s28, 0
        %s312 = smul.addr %s311, 8
        %s313 = scalar_lea.vmem %s1, %s312
        %p314 = pneg %p85
        %p315 = pneg %p82
        %p316 = scmp.lt.s32.totalorder %s28, 0
        %s317 = scalar_select %p316, %s28, 0
        %s318 = smul.addr %s317, 8
        %s319 = scalar_lea.vmem %s2, %s318
        %p320 = pneg %p111
        %p321 = pneg %p108
        %p322 = pneg %p132
        %p323 = pneg %p129
        %p324 = pneg %p153
        %p325 = pneg %p150
        %p326 = pneg %p174
        %p327 = pneg %p171
        %p328 = pneg %p202
        %p329 = pneg %p199
        %s330 = sand.u32 %s189, 1
        %s331 = scalar_lea.sflag [#allocation5], %s330
        %s332 = sand.u32 %s189, 1
        %s333 = smul.addr %s332, 8
        %s334 = scalar_lea.vmem [#allocation6], %s333
        %p335 = pneg %p228
        %p336 = pneg %p225
        %p337 = scmp.lt.s32.totalorder %s29, 7
        %s338 = scalar_select %p337, %s29, 7
        %p339 = scmp.lt.s32.totalorder %s28, 0
        %s340 = scalar_select %p339, %s28, 0
        %s341 = sadd.s32 %s340, %s338
        %s342 = smul.addr %s341, 8
        %s343 = scalar_lea.vmem %s0, %s342
        %p344 = scmp.lt.s32.totalorder %s28, 0
        %s345 = scalar_select %p344, %s28, 0
        %s346 = smul.addr %s345, 8
        %s347 = scalar_lea.vmem %s1, %s346
        %p348 = scmp.lt.s32.totalorder %s28, 0
        %s349 = scalar_select %p348, %s28, 0
        %s350 = smul.addr %s349, 8
        %s351 = scalar_lea.vmem %s2, %s350
        %p352 = scmp.eq.s32.totalorder %s29, 0
        // Predicated region
        $region49: #{tpu_custom_call.1} parent=43 // pred_check
          %p353 = pneg %p352
        $region50: #{tpu_custom_call.1} parent=43 // pred_check_branch
          %355 = sbr.rel (%p353) target = $region52
        $region51: #{tpu_custom_call.1} parent=43 // pred_region
          %v356 = vld [vmem:[%s347] sm:$0xff]
          %357 = vst [vmem:[#allocation2] sm:$0xff] %v356
          %v358 = vld [vmem:[%s351] sm:$0xff]
          %359 = vst [vmem:[#allocation7] sm:$0xff] %v358
        $region52: #{tpu_custom_call.1} parent=43 // pred_fallthru
          _
        %v360 = vld [vmem:[%s343] sm:$0xff]
        %v361 = vld [vmem:[#allocation2] sm:$0xff]
        %v362 = vld [vmem:[%s3] sm:$0x3f]
        %v363 = vld [vmem:[%s3 + $0x8] sm:$0x3f]
        %v364 = vld [vmem:[%s3 + $0x10] sm:$0x3f]
        %v365 = vld [vmem:[%s3 + $0x18] sm:$0x3f]
        %v366 = vld [vmem:[#allocation3] sm:$0xff]
        %v367 = vld [vmem:[#allocation3 + $0x8] sm:$0xff]
        %v368 = vld [vmem:[#allocation3 + $0x10] sm:$0xff]
        %v369 = vld [vmem:[#allocation3 + $0x18] sm:$0xff]
        %v370 = vld [vmem:[#allocation3 + $0x20] sm:$0xff]
        %v371 = vld [vmem:[#allocation3 + $0x28] sm:$0xff]
        %v372 = vld [vmem:[#allocation3 + $0x30] sm:$0xff]
        %v373 = vld [vmem:[#allocation3 + $0x38] sm:$0xff]
        %v374 = vld [vmem:[#allocation3 + $0x40] sm:$0xff]
        %v375 = vld [vmem:[#allocation3 + $0x48] sm:$0xff]
        %v376 = vld [vmem:[#allocation3 + $0x50] sm:$0xff]
        %v377 = vld [vmem:[#allocation3 + $0x58] sm:$0xff]
        %v378 = vld [vmem:[#allocation3 + $0x60] sm:$0xff]
        %v379 = vld [vmem:[#allocation3 + $0x68] sm:$0xff]
        %v380 = vld [vmem:[#allocation3 + $0x70] sm:$0xff]
        %v381 = vld [vmem:[#allocation3 + $0x78] sm:$0xff]
        %v382 = vld [vmem:[#allocation3 + $0x80] sm:$0xff]
        %v383 = vld [vmem:[#allocation3 + $0x88] sm:$0xff]
        %v384 = vld [vmem:[#allocation3 + $0x90] sm:$0xff]
        %v385 = vld [vmem:[#allocation3 + $0x98] sm:$0xff]
        %v386 = vld [vmem:[#allocation3 + $0xa0] sm:$0xff]
        %v387 = vld [vmem:[#allocation3 + $0xa8] sm:$0xff]
        %v388 = vld [vmem:[#allocation3 + $0xb0] sm:$0xff]
        %v389 = vld [vmem:[#allocation3 + $0xb8] sm:$0xff]
        %v390 = vld [vmem:[#allocation3 + $0xc0] sm:$0xff]
        %v391 = vld [vmem:[#allocation3 + $0xc8] sm:$0xff]
        %v392 = vld [vmem:[#allocation3 + $0xd0] sm:$0xff]
        %v393 = vld [vmem:[#allocation3 + $0xd8] sm:$0xff]
        %v394 = vld [vmem:[#allocation3 + $0xe0] sm:$0xff]
        %v395 = vld [vmem:[#allocation3 + $0xe8] sm:$0xff]
        %v396 = vld [vmem:[#allocation3 + $0xf0] sm:$0xff]
        %v397 = vld [vmem:[#allocation3 + $0xf8] sm:$0xff]
        %v398 = vld [vmem:[#allocation3 + $0x100] sm:$0xff]
        %v399 = vld [vmem:[#allocation3 + $0x108] sm:$0xff]
        %v400 = vld [vmem:[#allocation3 + $0x110] sm:$0xff]
        %v401 = vld [vmem:[#allocation3 + $0x118] sm:$0xff]
        %v402 = vld [vmem:[#allocation3 + $0x120] sm:$0xff]
        %v403 = vld [vmem:[#allocation3 + $0x128] sm:$0xff]
        %v404 = vld [vmem:[#allocation3 + $0x130] sm:$0xff]
        %v405 = vld [vmem:[#allocation3 + $0x138] sm:$0xff]
        %v406 = vld [vmem:[#allocation3 + $0x140] sm:$0xff]
        %v407 = vld [vmem:[#allocation3 + $0x148] sm:$0xff]
        %v408 = vld [vmem:[#allocation3 + $0x150] sm:$0xff]
        %v409 = vld [vmem:[#allocation3 + $0x158] sm:$0xff]
        %v410 = vld [vmem:[#allocation3 + $0x160] sm:$0xff]
        %v411 = vld [vmem:[#allocation3 + $0x168] sm:$0xff]
        %v412 = vld [vmem:[#allocation3 + $0x170] sm:$0xff]
        %v413 = vld [vmem:[#allocation3 + $0x178] sm:$0xff]
        %v414 = vld [vmem:[#allocation3 + $0x180] sm:$0xff]
        %v415 = vld [vmem:[#allocation3 + $0x188] sm:$0xff]
        %v416 = vld [vmem:[#allocation3 + $0x190] sm:$0xff]
        %v417 = vld [vmem:[#allocation3 + $0x198] sm:$0xff]
        %v418 = vld [vmem:[#allocation3 + $0x1a0] sm:$0xff]
        %v419 = vld [vmem:[#allocation3 + $0x1a8] sm:$0xff]
        %v420 = vld [vmem:[#allocation3 + $0x1b0] sm:$0xff]
        %v421 = vld [vmem:[#allocation3 + $0x1b8] sm:$0xff]
        %v422 = vld [vmem:[#allocation3 + $0x1c0] sm:$0xff]
        %v423 = vld [vmem:[#allocation3 + $0x1c8] sm:$0xff]
        %v424 = vld [vmem:[#allocation3 + $0x1d0] sm:$0xff]
        %v425 = vld [vmem:[#allocation3 + $0x1d8] sm:$0xff]
        %v426 = vld [vmem:[#allocation3 + $0x1e0] sm:$0xff]
        %v427 = vld [vmem:[#allocation3 + $0x1e8] sm:$0xff]
        %v428 = vld [vmem:[#allocation3 + $0x1f0] sm:$0xff]
        %v429 = vld [vmem:[#allocation3 + $0x1f8] sm:$0xff]
        %430 = vmatprep.subr.mxu0 %v427
        %431 = vmatpush1.msra.mxu0 %v426
        %432 = vmatprep.subr.mxu0 %v423
        %433 = vmatpush1.msra.mxu0 %v422
        %434 = vmatprep.subr.mxu0 %v419
        %435 = vmatpush1.msra.mxu0 %v418
        %436 = vmatprep.subr.mxu0 %v415
        %437 = vmatpush1.msra.mxu0 %v414
        %438 = vmatprep.subr.mxu0 %v411
        %439 = vmatpush1.msra.mxu0 %v410
        %440 = vmatprep.subr.mxu0 %v407
        %441 = vmatpush1.msra.mxu0 %v406
        %442 = vmatprep.subr.mxu0 %v403
        %443 = vmatpush1.msra.mxu0 %v402
        %444 = vmatprep.subr.mxu0 %v399
        %445 = vmatpush1.msra.mxu0 %v398
        %446 = vmatprep.subr.mxu0 %v395
        %447 = vmatpush1.msra.mxu0 %v394
        %448 = vmatprep.subr.mxu0 %v391
        %449 = vmatpush1.msra.mxu0 %v390
        %450 = vmatprep.subr.mxu0 %v387
        %451 = vmatpush1.msra.mxu0 %v386
        %452 = vmatprep.subr.mxu0 %v383
        %453 = vmatpush1.msra.mxu0 %v382
        %454 = vmatprep.subr.mxu0 %v379
        %455 = vmatpush1.msra.mxu0 %v378
        %456 = vmatprep.subr.mxu0 %v375
        %457 = vmatpush1.msra.mxu0 %v374
        %458 = vmatprep.subr.mxu0 %v371
        %459 = vmatpush1.msra.mxu0 %v370
        %460 = vmatprep.subr.mxu0 %v367
        %461 = vmatpush1.msra.mxu0 %v366
        %462 = vmatprep.subr.mxu0 0.0
        %463 = vmatpush2.msra.mxu0 0.0
        %464 = vmatprep.subr.mxu0 0.0
        %465 = vmatpush2.msra.mxu0 0.0
        %466 = vmatprep.subr.mxu0 0.0
        %467 = vmatpush2.msra.mxu0 0.0
        %468 = vmatprep.subr.mxu0 0.0
        %469 = vmatpush2.msra.mxu0 0.0
        %470 = vmatprep.subr.mxu0 0.0
        %471 = vmatpush2.msra.mxu0 0.0
        %472 = vmatprep.subr.mxu0 0.0
        %473 = vmatpush2.msra.mxu0 0.0
        %474 = vmatprep.subr.mxu0 0.0
        %475 = vmatpush2.msra.mxu0 0.0
        %476 = vmatprep.subr.mxu0 0.0
        %477 = vmatpush2.msra.mxu0 0.0
        %478 = vmatprep.subr.mxu0 0.0
        %479 = vmatpush2.msra.mxu0 0.0
        %480 = vmatprep.subr.mxu0 0.0
        %481 = vmatpush2.msra.mxu0 0.0
        %482 = vmatprep.subr.mxu0 0.0
        %483 = vmatpush2.msra.mxu0 0.0
        %484 = vmatprep.subr.mxu0 0.0
        %485 = vmatpush2.msra.mxu0 0.0
        %486 = vmatprep.subr.mxu0 0.0
        %487 = vmatpush2.msra.mxu0 0.0
        %488 = vmatprep.subr.mxu0 0.0
        %489 = vmatpush2.msra.mxu0 0.0
        %490 = vmatprep.subr.mxu0 0.0
        %491 = vmatpush2.msra.mxu0 0.0
        %492 = vmatprep.subr.mxu0 0.0
        %493 = vmatpush2.msra.mxu0 0.0
        %494 = vmatprep.mubr.f32.mxu0 0.0
        %495 = vmatmul.mubr.f32.gmra.mxu0 %v361
        %v496 = vpop.f32.mrf.mxu0
        %v497 = vadd.f32 0.0, %v496
        %v498 = vpop.f32.mrf.mxu0
        %v499 = vadd.f32 0.0, %v498
        %500 = vdwg.mxu0
        %501 = vmatprep.subr.mxu0 %v429
        %502 = vmatpush1.msra.mxu0 %v428
        %503 = vmatprep.subr.mxu0 %v425
        %504 = vmatpush1.msra.mxu0 %v424
        %505 = vmatprep.subr.mxu0 %v421
        %506 = vmatpush1.msra.mxu0 %v420
        %507 = vmatprep.subr.mxu0 %v417
        %508 = vmatpush1.msra.mxu0 %v416
        %509 = vmatprep.subr.mxu0 %v413
        %510 = vmatpush1.msra.mxu0 %v412
        %511 = vmatprep.subr.mxu0 %v409
        %512 = vmatpush1.msra.mxu0 %v408
        %513 = vmatprep.subr.mxu0 %v405
        %514 = vmatpush1.msra.mxu0 %v404
        %515 = vmatprep.subr.mxu0 %v401
        %516 = vmatpush1.msra.mxu0 %v400
        %517 = vmatprep.subr.mxu0 %v397
        %518 = vmatpush1.msra.mxu0 %v396
        %519 = vmatprep.subr.mxu0 %v393
        %520 = vmatpush1.msra.mxu0 %v392
        %521 = vmatprep.subr.mxu0 %v389
        %522 = vmatpush1.msra.mxu0 %v388
        %523 = vmatprep.subr.mxu0 %v385
        %524 = vmatpush1.msra.mxu0 %v384
        %525 = vmatprep.subr.mxu0 %v381
        %526 = vmatpush1.msra.mxu0 %v380
        %527 = vmatprep.subr.mxu0 %v377
        %528 = vmatpush1.msra.mxu0 %v376
        %529 = vmatprep.subr.mxu0 %v373
        %530 = vmatpush1.msra.mxu0 %v372
        %531 = vmatprep.subr.mxu0 %v369
        %532 = vmatpush1.msra.mxu0 %v368
        %533 = vmatprep.subr.mxu0 0.0
        %534 = vmatpush2.msra.mxu0 0.0
        %535 = vmatprep.subr.mxu0 0.0
        %536 = vmatpush2.msra.mxu0 0.0
        %537 = vmatprep.subr.mxu0 0.0
        %538 = vmatpush2.msra.mxu0 0.0
        %539 = vmatprep.subr.mxu0 0.0
        %540 = vmatpush2.msra.mxu0 0.0
        %541 = vmatprep.subr.mxu0 0.0
        %542 = vmatpush2.msra.mxu0 0.0
        %543 = vmatprep.subr.mxu0 0.0
        %544 = vmatpush2.msra.mxu0 0.0
        %545 = vmatprep.subr.mxu0 0.0
        %546 = vmatpush2.msra.mxu0 0.0
        %547 = vmatprep.subr.mxu0 0.0
        %548 = vmatpush2.msra.mxu0 0.0
        %549 = vmatprep.subr.mxu0 0.0
        %550 = vmatpush2.msra.mxu0 0.0
        %551 = vmatprep.subr.mxu0 0.0
        %552 = vmatpush2.msra.mxu0 0.0
        %553 = vmatprep.subr.mxu0 0.0
        %554 = vmatpush2.msra.mxu0 0.0
        %555 = vmatprep.subr.mxu0 0.0
        %556 = vmatpush2.msra.mxu0 0.0
        %557 = vmatprep.subr.mxu0 0.0
        %558 = vmatpush2.msra.mxu0 0.0
        %559 = vmatprep.subr.mxu0 0.0
        %560 = vmatpush2.msra.mxu0 0.0
        %561 = vmatprep.subr.mxu0 0.0
        %562 = vmatpush2.msra.mxu0 0.0
        %563 = vmatprep.subr.mxu0 0.0
        %564 = vmatpush2.msra.mxu0 0.0
        %565 = vmatprep.mubr.f32.mxu0 0.0
        %566 = vmatmul.mubr.f32.gmra.mxu0 %v361
        %v567 = vpop.f32.mrf.mxu0
        %v568 = vadd.f32 0.0, %v567
        %v569 = vpop.f32.mrf.mxu0
        %v570 = vadd.f32 0.0, %v569
        %571 = vdwg.mxu0
        %vm572 = vcmask 48128
        %v574 = vsel %vm572, %v360, 0
        %vm576 = vcmask 1045504
        %v578 = vsel %vm576, %v362, 0
        %v581 = vsel %vm576, %v363, 0
        %v584 = vsel %vm576, %v364, 0
        %v587 = vsel %vm576, %v365, 0
        %589 = vmatprep.subr.mxu0 0.0
        %590 = vmatpush1.msra.mxu0 0.0
        %591 = vmatprep.subr.mxu0 0.0
        %592 = vmatpush1.msra.mxu0 0.0
        %593 = vmatprep.subr.mxu0 0.0
        %594 = vmatpush1.msra.mxu0 0.0
        %595 = vmatprep.subr.mxu0 0.0
        %596 = vmatpush1.msra.mxu0 0.0
        %597 = vmatprep.subr.mxu0 0.0
        %598 = vmatpush1.msra.mxu0 0.0
        %599 = vmatprep.subr.mxu0 0.0
        %600 = vmatpush1.msra.mxu0 0.0
        %601 = vmatprep.subr.mxu0 0.0
        %602 = vmatpush1.msra.mxu0 0.0
        %603 = vmatprep.subr.mxu0 0.0
        %604 = vmatpush1.msra.mxu0 0.0
        %605 = vmatprep.subr.mxu0 0.0
        %606 = vmatpush1.msra.mxu0 0.0
        %607 = vmatprep.subr.mxu0 0.0
        %608 = vmatpush1.msra.mxu0 0.0
        %609 = vmatprep.subr.mxu0 0.0
        %610 = vmatpush1.msra.mxu0 0.0
        %611 = vmatprep.subr.mxu0 0.0
        %612 = vmatpush1.msra.mxu0 0.0
        %613 = vmatprep.subr.mxu0 0.0
        %614 = vmatpush1.msra.mxu0 0.0
        %615 = vmatprep.subr.mxu0 0.0
        %616 = vmatpush1.msra.mxu0 0.0
        %617 = vmatprep.subr.mxu0 0.0
        %618 = vmatpush1.msra.mxu0 0.0
        %619 = vmatprep.subr.mxu0 %v581
        %620 = vmatpush1.msra.mxu0 %v578
        %621 = vmatprep.subr.mxu0 0.0
        %622 = vmatpush2.msra.mxu0 0.0
        %623 = vmatprep.subr.mxu0 0.0
        %624 = vmatpush2.msra.mxu0 0.0
        %625 = vmatprep.subr.mxu0 0.0
        %626 = vmatpush2.msra.mxu0 0.0
        %627 = vmatprep.subr.mxu0 0.0
        %628 = vmatpush2.msra.mxu0 0.0
        %629 = vmatprep.subr.mxu0 0.0
        %630 = vmatpush2.msra.mxu0 0.0
        %631 = vmatprep.subr.mxu0 0.0
        %632 = vmatpush2.msra.mxu0 0.0
        %633 = vmatprep.subr.mxu0 0.0
        %634 = vmatpush2.msra.mxu0 0.0
        %635 = vmatprep.subr.mxu0 0.0
        %636 = vmatpush2.msra.mxu0 0.0
        %637 = vmatprep.subr.mxu0 0.0
        %638 = vmatpush2.msra.mxu0 0.0
        %639 = vmatprep.subr.mxu0 0.0
        %640 = vmatpush2.msra.mxu0 0.0
        %641 = vmatprep.subr.mxu0 0.0
        %642 = vmatpush2.msra.mxu0 0.0
        %643 = vmatprep.subr.mxu0 0.0
        %644 = vmatpush2.msra.mxu0 0.0
        %645 = vmatprep.subr.mxu0 0.0
        %646 = vmatpush2.msra.mxu0 0.0
        %647 = vmatprep.subr.mxu0 0.0
        %648 = vmatpush2.msra.mxu0 0.0
        %649 = vmatprep.subr.mxu0 0.0
        %650 = vmatpush2.msra.mxu0 0.0
        %651 = vmatprep.subr.mxu0 0.0
        %652 = vmatpush2.msra.mxu0 0.0
        %653 = vmatprep.mubr.f32.mxu0 0.0
        %654 = vmatmul.mubr.f32.gmra.mxu0 %v574
        %v655 = vpop.f32.mrf.mxu0
        %v656 = vadd.f32 %v497, %v655
        %v657 = vpop.f32.mrf.mxu0
        %v658 = vadd.f32 %v499, %v657
        %659 = vdwg.mxu0
        %660 = vmatprep.subr.mxu0 0.0
        %661 = vmatpush1.msra.mxu0 0.0
        %662 = vmatprep.subr.mxu0 0.0
        %663 = vmatpush1.msra.mxu0 0.0
        %664 = vmatprep.subr.mxu0 0.0
        %665 = vmatpush1.msra.mxu0 0.0
        %666 = vmatprep.subr.mxu0 0.0
        %667 = vmatpush1.msra.mxu0 0.0
        %668 = vmatprep.subr.mxu0 0.0
        %669 = vmatpush1.msra.mxu0 0.0
        %670 = vmatprep.subr.mxu0 0.0
        %671 = vmatpush1.msra.mxu0 0.0
        %672 = vmatprep.subr.mxu0 0.0
        %673 = vmatpush1.msra.mxu0 0.0
        %674 = vmatprep.subr.mxu0 0.0
        %675 = vmatpush1.msra.mxu0 0.0
        %676 = vmatprep.subr.mxu0 0.0
        %677 = vmatpush1.msra.mxu0 0.0
        %678 = vmatprep.subr.mxu0 0.0
        %679 = vmatpush1.msra.mxu0 0.0
        %680 = vmatprep.subr.mxu0 0.0
        %681 = vmatpush1.msra.mxu0 0.0
        %682 = vmatprep.subr.mxu0 0.0
        %683 = vmatpush1.msra.mxu0 0.0
        %684 = vmatprep.subr.mxu0 0.0
        %685 = vmatpush1.msra.mxu0 0.0
        %686 = vmatprep.subr.mxu0 0.0
        %687 = vmatpush1.msra.mxu0 0.0
        %688 = vmatprep.subr.mxu0 0.0
        %689 = vmatpush1.msra.mxu0 0.0
        %690 = vmatprep.subr.mxu0 %v587
        %691 = vmatpush1.msra.mxu0 %v584
        %692 = vmatprep.subr.mxu0 0.0
        %693 = vmatpush2.msra.mxu0 0.0
        %694 = vmatprep.subr.mxu0 0.0
        %695 = vmatpush2.msra.mxu0 0.0
        %696 = vmatprep.subr.mxu0 0.0
        %697 = vmatpush2.msra.mxu0 0.0
        %698 = vmatprep.subr.mxu0 0.0
        %699 = vmatpush2.msra.mxu0 0.0
        %700 = vmatprep.subr.mxu0 0.0
        %701 = vmatpush2.msra.mxu0 0.0
        %702 = vmatprep.subr.mxu0 0.0
        %703 = vmatpush2.msra.mxu0 0.0
        %704 = vmatprep.subr.mxu0 0.0
        %705 = vmatpush2.msra.mxu0 0.0
        %706 = vmatprep.subr.mxu0 0.0
        %707 = vmatpush2.msra.mxu0 0.0
        %708 = vmatprep.subr.mxu0 0.0
        %709 = vmatpush2.msra.mxu0 0.0
        %710 = vmatprep.subr.mxu0 0.0
        %711 = vmatpush2.msra.mxu0 0.0
        %712 = vmatprep.subr.mxu0 0.0
        %713 = vmatpush2.msra.mxu0 0.0
        %714 = vmatprep.subr.mxu0 0.0
        %715 = vmatpush2.msra.mxu0 0.0
        %716 = vmatprep.subr.mxu0 0.0
        %717 = vmatpush2.msra.mxu0 0.0
        %718 = vmatprep.subr.mxu0 0.0
        %719 = vmatpush2.msra.mxu0 0.0
        %720 = vmatprep.subr.mxu0 0.0
        %721 = vmatpush2.msra.mxu0 0.0
        %722 = vmatprep.subr.mxu0 0.0
        %723 = vmatpush2.msra.mxu0 0.0
        %724 = vmatprep.mubr.f32.mxu0 0.0
        %725 = vmatmul.mubr.f32.gmra.mxu0 %v574
        %v726 = vpop.f32.mrf.mxu0
        %v727 = vadd.f32 %v568, %v726
        %v728 = vpop.f32.mrf.mxu0
        %v729 = vadd.f32 %v570, %v728
        %730 = vdwg.mxu0
        %v731 = vld [vmem:[%s5] sm:$0xf]
        %v733 = vlaneseq
        %v734 = vshrl.u32 %v733, 7
        %v735 = vsub.s32 0, %v734
        %v736 = vrot.slane %v731, %v735
        %v737 = vlaneseq
        %v738 = vshrl.u32 %v737, 7
        %v739 = vsub.s32 1, %v738
        %v740 = vrot.slane %v731, %v739
        %v741 = vlaneseq
        %v742 = vshrl.u32 %v741, 7
        %v743 = vsub.s32 2, %v742
        %v744 = vrot.slane %v731, %v743
        %v745 = vlaneseq
        %v746 = vshrl.u32 %v745, 7
        %v747 = vsub.s32 3, %v746
        %v748 = vrot.slane %v731, %v747
        %v753 = vadd.f32 %v656, %v736
        %v754 = vadd.f32 %v658, %v740
        %v755 = vadd.f32 %v727, %v744
        %v756 = vadd.f32 %v729, %v748
        %v757 = vxor.u32 %v753, 2147483648
        %v758 = vmul.f32 %v757, 1.442695
        %v759 = vpow.pop %v758
        %v760 = vadd.f32 %v759, 1.0
        %v761 = vrcp.pop %v760
        %v762 = vmul.f32 1.0, %v761
        %v763 = vxor.u32 %v755, 2147483648
        %v764 = vmul.f32 %v763, 1.442695
        %v765 = vpow.pop %v764
        %v766 = vadd.f32 %v765, 1.0
        %v767 = vrcp.pop %v766
        %v768 = vmul.f32 1.0, %v767
        %v769 = vxor.u32 %v756, 2147483648
        %v770 = vmul.f32 %v769, 1.442695
        %v771 = vpow.pop %v770
        %v772 = vadd.f32 %v771, 1.0
        %v773 = vrcp.pop %v772
        %v774 = vmul.f32 1.0, %v773
        %v775 = vtanh.pop %v754
        %v776 = vld [vmem:[#allocation7] sm:$0xff]
        %v777 = vmul.f32 %v768, %v776
        %v778 = vmul.f32 %v762, %v775
        %v779 = vadd.f32 %v777, %v778
        %v780 = vtanh.pop %v779
        %v781 = vmul.f32 %v774, %v780
        %782 = vst [vmem:[#allocation7] sm:$0xff] %v779
        %783 = vst [vmem:[#allocation2] sm:$0xff] %v781
        %784 = vst [vmem:[%s334] sm:$0xff] %v781
        %s785 = sand.u32 %s189, 1
        %s786 = scalar_lea.sflag [#allocation5], %s785
        %s787 = sand.u32 %s189, 1
        %s788 = smul.addr %s787, 8
        %s789 = scalar_lea.vmem [#allocation6], %s788
        // Predicated region
        $region53: #{tpu_custom_call.1} parent=43 // pred_check
          %p790 = pneg %p199
        $region54: #{tpu_custom_call.1} parent=43 // pred_check_branch
          %792 = sbr.rel (%p790) target = $region56
        $region55: #{tpu_custom_call.1} parent=43 // pred_region
          %s794 = ssub.s32 128, 128
          %795 = vsyncadd %s786, %s794
          %s796 = sadd.s32 %s28, %s29
          %s797 = smul.addr %s796, 128
          %s798 = scalar_lea.hbm %s6, %s797
          %s800 = sshll.u32 %s789, 4
          %s801 = int_to_ptr.vmem [resolvable:$true] %s800
          %803 = dma.vmem_to_hbm [thread:$0]  %s801, 128, %s798, %s786
        $region56: #{tpu_custom_call.1} parent=43 // pred_fallthru
          _
        // Predicated region
        $region57: #{tpu_custom_call.1} parent=43 // pred_check
          %p804 = pneg %p225
        $region58: #{tpu_custom_call.1} parent=43 // pred_check_branch
          %806 = sbr.rel (%p804) target = $region60
        $region59: #{tpu_custom_call.1} parent=43 // pred_region
          %s808 = ssub.s32 128, 128
          %809 = vsyncadd [#allocation8], %s808
          %s810 = smul.addr %s28, 128
          %s811 = scalar_lea.hbm %s7, %s810
          %s813 = sshll.u32 [#allocation7], 4
          %s814 = int_to_ptr.vmem [resolvable:$true] %s813
          %816 = dma.vmem_to_hbm [thread:$0]  %s814, 128, %s811, [#allocation8]
        $region60: #{tpu_custom_call.1} parent=43 // pred_fallthru
          _
        // Predicated region
        $region61: #{tpu_custom_call.1} parent=43 // pred_check
          %p817 = pneg %p225
        $region62: #{tpu_custom_call.1} parent=43 // pred_check_branch
          %819 = sbr.rel (%p817) target = $region64
        $region63: #{tpu_custom_call.1} parent=43 // pred_region
          %820 = dma.done [#allocation8], 128
        $region64: #{tpu_custom_call.1} parent=43 // pred_fallthru
          _
      $region44: #{tpu_custom_call.1} parent=5 // pred_fallthru
        _
      %p821 = scmp.le.s32.totalorder 2, %s19
      // Predicated region
      $region65: #{tpu_custom_call.1} parent=5 // pred_check
        %p822 = pneg %p821
      $region66: #{tpu_custom_call.1} parent=5 // pred_check_branch
        %824 = sbr.rel (%p822) target = $region68
      $region67: #{tpu_custom_call.1} parent=5 // pred_region
        %s825 = ssub.s32 %s19, 2
        // Predicated region
        $region69: #{tpu_custom_call.1} parent=67 // pred_check
          %p826 = pneg %p205
        $region70: #{tpu_custom_call.1} parent=67 // pred_check_branch
          %828 = sbr.rel (%p826) target = $region72
        $region71: #{tpu_custom_call.1} parent=67 // pred_region
          %s829 = sand.u32 %s190, 1
          %s830 = scalar_lea.sflag [#allocation5], %s829
          %s831 = sand.u32 %s190, 1
          %s832 = smul.addr %s831, 8
          %s833 = scalar_lea.vmem [#allocation6], %s832
          %834 = dma.done %s830, 128
        $region72: #{tpu_custom_call.1} parent=67 // pred_fallthru
          _
      $region68: #{tpu_custom_call.1} parent=5 // pred_fallthru
        _
    $region6: #{tpu_custom_call.1} parent=1 // loop_footer
      %s23 = sadd.s32 1, %s19
    $region7: #{tpu_custom_call.1} parent=1 // loop_footer_branch
      %18 = sbr.rel target = $region3
    $region8: #{tpu_custom_call.1} parent=1 // loop_exit
      _
    %835 = vsyncpa [#allocation4], 1
    %s836 = scalar_lea.sflag [#allocation4], 1
    %837 = vsyncpa %s836, 1
    %838 = vsyncpa [#allocation5], 1
    %s839 = scalar_lea.sflag [#allocation5], 1
    %840 = vsyncpa %s839, 1
    %841 = vsyncpa [#allocation8], 1

</llo_original>
